<compile_context>
chip_gen: v5e
topology: v5e:2x2
jax: 0.10.0
libtpu: 0.0.40
codegen_flags: <defaults>
</compile_context>

<pallas_src>
from functools import partial

import jax
import jax.numpy as jnp
from jax.experimental import pallas as pl
from jax.experimental.pallas import tpu as pltpu


def se_block_kernel(x_ref, w1_ref, w2t_ref, o_ref, *, inv_hw):
    # x_ref: (Bb, C, HW); w1_ref: (C//r, C); w2t_ref: (C//r, C); o_ref: (Bb, C, HW)
    x = x_ref[...].astype(jnp.float32)                       # (Bb, C, HW)

    # --- squeeze: global average pool over spatial (lane) axis ---
    # Fold the 1/HW into a constant multiply instead of jnp.mean's divide.
    se = jnp.sum(x, axis=2) * inv_hw                         # (Bb, C)

    # --- excite: fc1 -> relu -> fc2 -> sigmoid (lane-dense, batched) ---
    # fc1: contract the (lane-dense) C axis of both operands -> (Bb, C//r)
    h = jax.lax.dot_general(
        se, w1_ref[...].astype(jnp.float32),
        dimension_numbers=(((1,), (1,)), ((), ())),
        preferred_element_type=jnp.float32)                  # (Bb, C//r)
    h = jnp.maximum(h, 0.0)
    # fc2 with w2 stored transposed (C//r, C): lane-dense (Bb, C) output.
    gate = jax.nn.sigmoid(
        jnp.dot(h, w2t_ref[...].astype(jnp.float32),
                preferred_element_type=jnp.float32))         # (Bb, C)

    # --- scale: broadcast channel gate over spatial ---
    o_ref[...] = (x * gate[:, :, None]).astype(o_ref.dtype)


def _choose_batch_block(B, C, HW, itemsize, vmem_budget_bytes):
    """Largest divisor of B whose pipelined VMEM use fits the budget and
    leaves >= 2 grid steps (so both v7x TensorCores are used)."""
    per_batch = C * HW * itemsize
    # pipelined cost ~ 2 buffers x (input block + output block) = 4 * Bb * per_batch
    max_bb = max(1, vmem_budget_bytes // (4 * per_batch))
    if B >= 2:
        max_bb = min(max_bb, B // 2)
    max_bb = int(max(1, min(max_bb, B)))
    return max(d for d in range(1, max_bb + 1) if B % d == 0)


def se_block(x_nchw, w1, w2, *, vmem_budget_bytes=16 * 1024 * 1024):
    """x_nchw: (B, C, H, W). w1: (C//r, C). w2: (C, C//r) (PyTorch Linear layout)."""
    B, C, H, W = x_nchw.shape
    HW = H * W
    x_flat = x_nchw.reshape(B, C, HW)
    # Store the second FC weight with C on the lane axis (lane-dense).
    w2t = jnp.transpose(w2)                                  # (C//r, C)

    itemsize = jnp.dtype(x_nchw.dtype).itemsize
    bb = _choose_batch_block(B, C, HW, itemsize, vmem_budget_bytes)
    grid = (B // bb,)

    kernel = partial(se_block_kernel, inv_hw=float(1.0 / HW))

    out_flat = pl.pallas_call(
        kernel,
        out_shape=jax.ShapeDtypeStruct((B, C, HW), x_nchw.dtype),
        grid_spec=pltpu.PrefetchScalarGridSpec(
            num_scalar_prefetch=0,
            grid=grid,
            in_specs=[
                pl.BlockSpec((bb, C, HW), lambda b: (b, 0, 0)),
                pl.BlockSpec(w1.shape, lambda b: (0, 0)),
                pl.BlockSpec(w2t.shape, lambda b: (0, 0)),
            ],
            out_specs=pl.BlockSpec((bb, C, HW), lambda b: (b, 0, 0)),
        ),
        compiler_params=pltpu.CompilerParams(
            dimension_semantics=("parallel",),
            vmem_limit_bytes=32 * 1024 * 1024,
        ),
    )(x_flat, w1, w2t)

    return out_flat.reshape(B, C, H, W)


def se_block_ref(x, w1, w2):
    """Pure-JAX reference mirroring the PyTorch forward."""
    se = jnp.mean(x, axis=(2, 3))                 # (B, C)
    se = jnp.maximum(se @ w1.T, 0.0)              # (B, C//r)
    se = jax.nn.sigmoid(se @ w2.T)                # (B, C)
    return x * se[:, :, None, None]


if __name__ == "__main__":
    # Shapes consistent with SEBlock(channels=32, reduction=16)
    B, C, H, W = 2, 32, 16, 16
    reduction = 16
    hidden = C // reduction  # = 2

    key = jax.random.PRNGKey(0)
    kx, k1, k2 = jax.random.split(key, 3)

    x = jax.random.normal(kx, (B, C, H, W), dtype=jnp.float32)
    # PyTorch Linear weight layout: (out_features, in_features)
    w1 = jax.random.normal(k1, (hidden, C), dtype=jnp.float32) * 0.1
    w2 = jax.random.normal(k2, (C, hidden), dtype=jnp.float32) * 0.1

    out = se_block(x, w1, w2)
    out = jax.block_until_ready(out)

    ref = se_block_ref(x, w1, w2)
    assert out.shape == (B, C, H, W)
    assert jnp.allclose(out, ref, atol=1e-5, rtol=1e-5)

    print("KERNEL_OK")
</pallas_src>

<mosaic_0001>
module attributes {stable_mosaic.version = 11 : i64} {
  func.func @se_block_kernel(%arg0: i32, %arg1: memref<1x32x256xf32, #tpu.memory_space<vmem>>, %arg2: memref<2x32xf32, #tpu.memory_space<vmem>>, %arg3: memref<2x32xf32, #tpu.memory_space<vmem>>, %arg4: memref<1x32x256xf32, #tpu.memory_space<vmem>>) attributes {dimension_semantics = [#tpu.dimension_semantics<parallel>], iteration_bounds = array<i64: 2>, scalar_prefetch = 0 : i64, scratch_operands = 0 : i64, tpu.core_type = #tpu.core_type<tc>, window_params = [{transform_indices = @transform_0, window_bounds = array<i64: 1, 32, 256>}, {pipeline_mode = #tpu.pipeline_mode<synchronous>, transform_indices = @transform_1, window_bounds = array<i64: 2, 32>}, {pipeline_mode = #tpu.pipeline_mode<synchronous>, transform_indices = @transform_2, window_bounds = array<i64: 2, 32>}, {transform_indices = @transform_3, window_bounds = array<i64: 1, 32, 256>}]} {
    %c0 = arith.constant 0 : index
    %c0_0 = arith.constant 0 : index
    %c0_1 = arith.constant 0 : index
    %0 = vector.load %arg1[%c0, %c0_0, %c0_1] : memref<1x32x256xf32, #tpu.memory_space<vmem>>, vector<1x32x256xf32>
    %cst = arith.constant dense<0.000000e+00> : vector<1x32xf32>
    %1 = vector.multi_reduction <add>, %0, %cst [2] : vector<1x32x256xf32> to vector<1x32xf32>
    %cst_2 = arith.constant 3.906250e-03 : f32
    %2 = vector.broadcast %cst_2 : f32 to vector<1x32xf32>
    %3 = arith.mulf %1, %2 : vector<1x32xf32>
    %c0_3 = arith.constant 0 : index
    %c0_4 = arith.constant 0 : index
    %4 = vector.load %arg2[%c0_3, %c0_4] : memref<2x32xf32, #tpu.memory_space<vmem>>, vector<2x32xf32>
    %cst_5 = arith.constant dense<0.000000e+00> : vector<1x2xf32>
    %5 = tpu.matmul %3, %4, %cst_5 {dimension_numbers = #tpu.dot_dimension_numbers<[1], [1], [0], [0], [0, 0, 1, 0], [], []>} : vector<1x32xf32>, vector<2x32xf32>, vector<1x2xf32> -> vector<1x2xf32>
    %cst_6 = arith.constant 0.000000e+00 : f32
    %6 = vector.broadcast %cst_6 : f32 to vector<1x2xf32>
    %7 = arith.maximumf %5, %6 : vector<1x2xf32>
    %c0_7 = arith.constant 0 : index
    %c0_8 = arith.constant 0 : index
    %8 = vector.load %arg3[%c0_7, %c0_8] : memref<2x32xf32, #tpu.memory_space<vmem>>, vector<2x32xf32>
    %cst_9 = arith.constant dense<0.000000e+00> : vector<1x32xf32>
    %9 = tpu.matmul %7, %8, %cst_9 {dimension_numbers = #tpu.dot_dimension_numbers<[1], [0], [0], [1], [0, 0, 1, 1], [], []>} : vector<1x2xf32>, vector<2x32xf32>, vector<1x32xf32> -> vector<1x32xf32>
    %10 = arith.negf %9 : vector<1x32xf32>
    %11 = math.exp %10 : vector<1x32xf32>
    %cst_10 = arith.constant 1.000000e+00 : f32
    %12 = vector.broadcast %cst_10 : f32 to vector<1x32xf32>
    %13 = arith.addf %12, %11 : vector<1x32xf32>
    %14 = arith.divf %12, %13 : vector<1x32xf32>
    %15 = vector.shape_cast %14 : vector<1x32xf32> to vector<1x32x1xf32>
    %16 = vector.broadcast %15 : vector<1x32x1xf32> to vector<1x32x256xf32>
    %17 = arith.mulf %0, %16 : vector<1x32x256xf32>
    %c0_11 = arith.constant 0 : index
    %c0_12 = arith.constant 0 : index
    %c0_13 = arith.constant 0 : index
    %18 = vector.load %arg4[%c0_11, %c0_12, %c0_13] : memref<1x32x256xf32, #tpu.memory_space<vmem>>, vector<1x32x256xf32>
    tpu.vector_store %arg4[%c0_11, %c0_12, %c0_13], %17 {strides = array<i32>} : memref<1x32x256xf32, #tpu.memory_space<vmem>>, vector<1x32x256xf32>,
    return
  }
  func.func @transform_0(%arg0: i32) -> (i32, i32, i32) {
    %c0_i32 = arith.constant 0 : i32
    %c0_i32_0 = arith.constant 0 : i32
    %c0_i32_1 = arith.constant 0 : i32
    return %arg0, %c0_i32, %c0_i32_0 : i32, i32, i32
  }
  func.func @transform_1(%arg0: i32) -> (i32, i32) {
    %c0_i32 = arith.constant 0 : i32
    %c0_i32_0 = arith.constant 0 : i32
    %c0_i32_1 = arith.constant 0 : i32
    return %c0_i32, %c0_i32_0 : i32, i32
  }
  func.func @transform_2(%arg0: i32) -> (i32, i32) {
    %c0_i32 = arith.constant 0 : i32
    %c0_i32_0 = arith.constant 0 : i32
    %c0_i32_1 = arith.constant 0 : i32
    return %c0_i32, %c0_i32_0 : i32, i32
  }
  func.func @transform_3(%arg0: i32) -> (i32, i32, i32) {
    %c0_i32 = arith.constant 0 : i32
    %c0_i32_0 = arith.constant 0 : i32
    %c0_i32_1 = arith.constant 0 : i32
    return %arg0, %c0_i32, %c0_i32_0 : i32, i32, i32
  }
}

</mosaic_0001>

<llo_original>
// kernel: tpu_custom_call.1
$region0: #{tpu_custom_call.1}
  #allocation0 [shape = 'u32[]', space=smem, size = 0x4, offset = 0x4, fixed_abs, tag = 'smem constant byte address 0x4 - core index']
  #allocation1 [shape = 'u32[72,128]{1,0:T(1,128)}', space=vmem, size = 0x9000, scoped, tag = 'internal scratch']
  %s0 = inlined_call_operand.hbm [shape: f32[2,32,256], index: 0, kind: input, shape index: {}]
  %s1 = inlined_call_operand.hbm [shape: f32[2,32], index: 1, kind: input, shape index: {}]
  %s2 = inlined_call_operand.hbm [shape: f32[2,32], index: 2, kind: input, shape index: {}]
  %s3 = inlined_call_operand.hbm [shape: f32[2,32,256], index: 3, kind: output, shape index: {}]
  %s4 = sld [smem:[#allocation0]]
  $region57: #{tpu_custom_call.1} parent=0
    _
  %s6 = ssub.s32 1, %s4
  %s7 = scalar_select 0, %s6, %s4
  $region1: #{tpu_custom_call.1} parent=0
    #allocation2 [shape = 'u8[65536]{0}', space=vmem, size = 0x10000, scoped, tag = 'input window, operand 0']
    #allocation3 [shape = 's32[2]{0}', space=sflag, size = 0x8, scoped, tag = 'scoped memory for tpu_custom_call.1']
    #allocation4 [shape = 's32[2]{0}', space=sflag, size = 0x8, scoped, tag = 'scoped memory for tpu_custom_call.1']
    #allocation5 [shape = 'u8[1024]{0}', space=vmem, size = 0x400, scoped, tag = 'input window, operand 1, single buffered']
    #allocation6 [shape = 's32[1]{0}', space=sflag, size = 0x4, scoped, tag = 'scoped memory for tpu_custom_call.1']
    #allocation7 [shape = 'u8[1024]{0}', space=vmem, size = 0x400, scoped, tag = 'input window, operand 2, single buffered']
    #allocation8 [shape = 'u8[65536]{0}', space=vmem, size = 0x10000, scoped, tag = 'output window, operand 0']
    %8 = vsyncpa [#allocation3], 0
    %s9 = scalar_lea.sflag [#allocation3], 1
    %10 = vsyncpa %s9, 0
    %11 = vsyncpa [#allocation6], 0
    %12 = vsyncpa [#allocation4], 0
    %s13 = scalar_lea.sflag [#allocation4], 1
    %14 = vsyncpa %s13, 0
    loop: start=0, step=1, limit=4
    $region2: #{tpu_custom_call.1} parent=1 // loop_pre_header
      _
    $region3: #{tpu_custom_call.1} parent=1 // loop_header
      %s16 = sphi 0, %s20
      %p17 = scmp.ge.s32.totalorder %s16, 4
      %s26 = sphi 0, %s28
      %s29 = sphi 0, %s26
      %s30 = sphi 0, %s29
      %s46 = sphi 0, %s30
      %s50 = sphi 0, %s50
      %s52 = sphi 0, %s50
      %s53 = sphi 0, %s52
      %s67 = sphi 0, %s53
      %s71 = sphi 0, %s71
      %s73 = sphi 0, %s71
      %s74 = sphi 0, %s73
      %s88 = sphi 0, %s74
      %s94 = sphi 0, %s96
      %s97 = sphi 0, %s94
      %s98 = sphi 0, %s97
      %s114 = sphi 0, %s98
    $region4: #{tpu_custom_call.1} parent=1 // loop_header_branch
      %19 = sbr.rel (%p17) target = $region8
    $region5: #{tpu_custom_call.1} parent=1 // loop_body
      %s21 = ssub.s32 %s16, 1
      %s22 = ssub.s32 %s16, 2
      %s23 = sadd.s32 %s16, 1
      %s24 = ssub.s32 %s16, %s23
      %p25 = scmp.eq.s32.totalorder %s24, 0
      %s27 = sadd.s32 %s26, 1
      %s28 = scalar_select %p25, %s26, %s27
      %p31 = pneg %p25
      %p32 = scmp.eq.s32.totalorder %s16, 1
      %p33 = por %p31, %p32
      %p34 = scmp.ne.s32.totalorder %s26, %s29
      %p35 = scmp.eq.s32.totalorder %s16, 0
      %p36 = por %p34, %p35
      %p37 = scmp.ne.s32.totalorder %s26, %s29
      %p38 = scmp.eq.s32.totalorder %s21, 1
      %p39 = por %p37, %p38
      %p40 = scmp.ne.s32.totalorder %s29, %s30
      %p41 = scmp.eq.s32.totalorder %s21, 0
      %p42 = por %p40, %p41
      %p43 = scmp.ne.s32.totalorder %s29, %s30
      %p44 = scmp.eq.s32.totalorder %s22, 1
      %p45 = por %p43, %p44
      %p47 = scmp.ne.s32.totalorder %s30, %s46
      %p48 = scmp.eq.s32.totalorder %s22, 0
      %p49 = por %p47, %p48
      %s51 = sadd.s32 %s50, 1
      %p54 = scmp.eq.s32.totalorder %s16, 1
      %p55 = scmp.ne.s32.totalorder %s50, %s52
      %p56 = scmp.eq.s32.totalorder %s16, 0
      %p57 = por %p55, %p56
      %p58 = scmp.ne.s32.totalorder %s50, %s52
      %p59 = scmp.eq.s32.totalorder %s21, 1
      %p60 = por %p58, %p59
      %p61 = scmp.ne.s32.totalorder %s52, %s53
      %p62 = scmp.eq.s32.totalorder %s21, 0
      %p63 = por %p61, %p62
      %p64 = scmp.ne.s32.totalorder %s52, %s53
      %p65 = scmp.eq.s32.totalorder %s22, 1
      %p66 = por %p64, %p65
      %p68 = scmp.ne.s32.totalorder %s53, %s67
      %p69 = scmp.eq.s32.totalorder %s22, 0
      %p70 = por %p68, %p69
      %s72 = sadd.s32 %s71, 1
      %p75 = scmp.eq.s32.totalorder %s16, 1
      %p76 = scmp.ne.s32.totalorder %s71, %s73
      %p77 = scmp.eq.s32.totalorder %s16, 0
      %p78 = por %p76, %p77
      %p79 = scmp.ne.s32.totalorder %s71, %s73
      %p80 = scmp.eq.s32.totalorder %s21, 1
      %p81 = por %p79, %p80
      %p82 = scmp.ne.s32.totalorder %s73, %s74
      %p83 = scmp.eq.s32.totalorder %s21, 0
      %p84 = por %p82, %p83
      %p85 = scmp.ne.s32.totalorder %s73, %s74
      %p86 = scmp.eq.s32.totalorder %s22, 1
      %p87 = por %p85, %p86
      %p89 = scmp.ne.s32.totalorder %s74, %s88
      %p90 = scmp.eq.s32.totalorder %s22, 0
      %p91 = por %p89, %p90
      %s92 = ssub.s32 %s16, %s23
      %p93 = scmp.eq.s32.totalorder %s92, 0
      %s95 = sadd.s32 %s94, 1
      %s96 = scalar_select %p93, %s94, %s95
      %p99 = pneg %p93
      %p100 = scmp.eq.s32.totalorder %s16, 1
      %p101 = por %p99, %p100
      %p102 = scmp.ne.s32.totalorder %s94, %s97
      %p103 = scmp.eq.s32.totalorder %s16, 0
      %p104 = por %p102, %p103
      %p105 = scmp.ne.s32.totalorder %s94, %s97
      %p106 = scmp.eq.s32.totalorder %s21, 1
      %p107 = por %p105, %p106
      %p108 = scmp.ne.s32.totalorder %s97, %s98
      %p109 = scmp.eq.s32.totalorder %s21, 0
      %p110 = por %p108, %p109
      %p111 = scmp.ne.s32.totalorder %s97, %s98
      %p112 = scmp.eq.s32.totalorder %s22, 1
      %p113 = por %p111, %p112
      %p115 = scmp.ne.s32.totalorder %s98, %s114
      %p116 = scmp.eq.s32.totalorder %s22, 0
      %p117 = por %p115, %p116
      %p118 = scmp.le.s32.totalorder 1, %s16
      %p119 = scmp.lt.s32.totalorder %s16, 3
      %p120 = pnand %p118, %p119
      %p121 = pneg %p120
      // Predicated region
      $region9: #{tpu_custom_call.1} parent=5 // pred_check
        _
      $region10: #{tpu_custom_call.1} parent=5 // pred_check_branch
        %123 = sbr.rel (%p120) target = $region12
      $region11: #{tpu_custom_call.1} parent=5 // pred_region
        %s124 = ssub.s32 %s16, 1
        // Predicated region
        $region13: #{tpu_custom_call.1} parent=11 // pred_check
          %p125 = pneg %p63
        $region14: #{tpu_custom_call.1} parent=11 // pred_check_branch
          %127 = sbr.rel (%p125) target = $region16
        $region15: #{tpu_custom_call.1} parent=11 // pred_region
          %129 = vsyncadd [#allocation6], 0
          %s131 = sshll.u32 %s1, 4
          %s132 = int_to_ptr.hbm [resolvable:$true] %s131
          %s133 = sshll.u32 [#allocation5], 4
          %s134 = int_to_ptr.vmem [resolvable:$true] %s133
          %136 = dma.hbm_to_vmem [thread:$0]  %s132, 32, %s134, [#allocation6]
        $region16: #{tpu_custom_call.1} parent=11 // pred_fallthru
          _
        // Predicated region
        $region17: #{tpu_custom_call.1} parent=11 // pred_check
          %p137 = pneg %p84
        $region18: #{tpu_custom_call.1} parent=11 // pred_check_branch
          %139 = sbr.rel (%p137) target = $region20
        $region19: #{tpu_custom_call.1} parent=11 // pred_region
          %141 = vsyncadd [#allocation6], 0
          %s143 = sshll.u32 %s2, 4
          %s144 = int_to_ptr.hbm [resolvable:$true] %s143
          %s145 = sshll.u32 [#allocation7], 4
          %s146 = int_to_ptr.vmem [resolvable:$true] %s145
          %148 = dma.hbm_to_vmem [thread:$0]  %s144, 32, %s146, [#allocation6]
        $region20: #{tpu_custom_call.1} parent=11 // pred_fallthru
          _
      $region12: #{tpu_custom_call.1} parent=5 // pred_fallthru
        _
      %p149 = scmp.lt.s32.totalorder %s16, 2
      // Predicated region
      $region21: #{tpu_custom_call.1} parent=5 // pred_check
        %p150 = pneg %p149
      $region22: #{tpu_custom_call.1} parent=5 // pred_check_branch
        %152 = sbr.rel (%p150) target = $region24
      $region23: #{tpu_custom_call.1} parent=5 // pred_region
        // Predicated region
        $region25: #{tpu_custom_call.1} parent=23 // pred_check
          %p153 = pneg %p36
        $region26: #{tpu_custom_call.1} parent=23 // pred_check_branch
          %155 = sbr.rel (%p153) target = $region28
        $region27: #{tpu_custom_call.1} parent=23 // pred_region
          %s156 = sand.u32 %s26, 1
          %s157 = scalar_lea.sflag [#allocation3], %s156
          %s158 = sand.u32 %s26, 1
          %s159 = smul.addr %s158, 64
          %s160 = scalar_lea.vmem [#allocation2], %s159
          %162 = vsyncadd %s157, 0
          %s163 = smul.addr %s16, 8
          %s164 = smul.addr %s163, 8
          %s165 = scalar_lea.hbm %s0, %s164
          %s166 = sshll.u32 %s165, 4
          %s167 = int_to_ptr.hbm [resolvable:$true] %s166
          %s168 = sshll.u32 %s160, 4
          %s169 = int_to_ptr.vmem [resolvable:$true] %s168
          %174 = dma.hbm_to_vmem [thread:$0]  %s167, 1024, %s169, %s157, 256, 256, 16
        $region28: #{tpu_custom_call.1} parent=23 // pred_fallthru
          _
      $region24: #{tpu_custom_call.1} parent=5 // pred_fallthru
        _
      %p175 = scmp.le.s32.totalorder 1, %s16
      %p176 = scmp.lt.s32.totalorder %s16, 3
      %p177 = pnand %p175, %p176
      %p178 = pneg %p177
      // Predicated region
      $region29: #{tpu_custom_call.1} parent=5 // pred_check
        _
      $region30: #{tpu_custom_call.1} parent=5 // pred_check_branch
        %180 = sbr.rel (%p177) target = $region32
      $region31: #{tpu_custom_call.1} parent=5 // pred_region
        %s181 = ssub.s32 %s16, 1
        %s182 = sand.u32 %s29, 1
        %s183 = scalar_lea.sflag [#allocation3], %s182
        %s184 = sand.u32 %s29, 1
        %s185 = smul.addr %s184, 64
        %s186 = scalar_lea.vmem [#allocation2], %s185
        // Predicated region
        $region33: #{tpu_custom_call.1} parent=31 // pred_check
          %p187 = pneg %p42
        $region34: #{tpu_custom_call.1} parent=31 // pred_check_branch
          %189 = sbr.rel (%p187) target = $region36
        $region35: #{tpu_custom_call.1} parent=31 // pred_region
          %191 = dma.done %s183, 1024
        $region36: #{tpu_custom_call.1} parent=31 // pred_fallthru
          _
        // Predicated region
        $region37: #{tpu_custom_call.1} parent=31 // pred_check
          %p192 = pneg %p63
        $region38: #{tpu_custom_call.1} parent=31 // pred_check_branch
          %194 = sbr.rel (%p192) target = $region40
        $region39: #{tpu_custom_call.1} parent=31 // pred_region
          %196 = dma.done [#allocation6], 32
        $region40: #{tpu_custom_call.1} parent=31 // pred_fallthru
          _
        // Predicated region
        $region41: #{tpu_custom_call.1} parent=31 // pred_check
          %p197 = pneg %p84
        $region42: #{tpu_custom_call.1} parent=31 // pred_check_branch
          %199 = sbr.rel (%p197) target = $region44
        $region43: #{tpu_custom_call.1} parent=31 // pred_region
          %201 = dma.done [#allocation6], 32
        $region44: #{tpu_custom_call.1} parent=31 // pred_fallthru
          _
        %s202 = sand.u32 %s29, 1
        %s203 = scalar_lea.sflag [#allocation3], %s202
        %s204 = sand.u32 %s29, 1
        %s205 = smul.addr %s204, 64
        %s206 = scalar_lea.vmem [#allocation2], %s205
        %p207 = pneg %p42
        %p208 = pneg %p39
        %p209 = pneg %p63
        %p210 = pneg %p60
        %p211 = pneg %p84
        %p212 = pneg %p81
        %p213 = pneg %p110
        %p214 = pneg %p107
        %s215 = sand.u32 %s97, 1
        %s216 = scalar_lea.sflag [#allocation4], %s215
        %s217 = sand.u32 %s97, 1
        %s218 = smul.addr %s217, 64
        %s219 = scalar_lea.vmem [#allocation8], %s218
        %v220 = vld [vmem:[%s186] sm:$0xff]
        %v221 = vld [vmem:[%s186 + $0x8] sm:$0xff]
        %v222 = vld [vmem:[%s186 + $0x10] sm:$0xff]
        %v223 = vld [vmem:[%s186 + $0x18] sm:$0xff]
        %v224 = vld [vmem:[%s186 + $0x20] sm:$0xff]
        %v225 = vld [vmem:[%s186 + $0x28] sm:$0xff]
        %v226 = vld [vmem:[%s186 + $0x30] sm:$0xff]
        %v227 = vld [vmem:[%s186 + $0x38] sm:$0xff]
        %v228 = vadd.f32 %v220, %v221
        %229 = vadd.xlane.f32.xlu0 %v228
        %v230 = vpop.xlane.xlu0 %229
        %v231 = vadd.f32 %v222, %v223
        %232 = vadd.xlane.f32.xlu0 %v231
        %v233 = vpop.xlane.xlu0 %232
        %v234 = vadd.f32 %v224, %v225
        %235 = vadd.xlane.f32.xlu0 %v234
        %v236 = vpop.xlane.xlu0 %235
        %v237 = vadd.f32 %v226, %v227
        %238 = vadd.xlane.f32.xlu0 %v237
        %v239 = vpop.xlane.xlu0 %238
        %v240 = vmul.f32 %v230, 0.00390625
        %v241 = vmul.f32 %v233, 0.00390625
        %v242 = vmul.f32 %v236, 0.00390625
        %v243 = vmul.f32 %v239, 0.00390625
        %v244 = vld [vmem:[#allocation5] sm:$0x3]
        %v249 = vlaneseq
        %v250 = vand.u32 %v249, 127
        %v251 = vperm.slane %v240, %v250
        %v252 = vadd.s32 %v250, 4294967288
        %v253 = vperm.slane %v241, %v252
        %vm254 = vcmask 130112
        %v255 = vsel %vm254, %v253, %v251
        %v256 = vadd.s32 %v250, 4294967280
        %v257 = vperm.slane %v242, %v256
        %vm258 = vcmask 195712
        %v259 = vsel %vm258, %v257, %v255
        %v260 = vadd.s32 %v250, 4294967272
        %v261 = vperm.slane %v243, %v260
        %vm262 = vcmask 261312
        %v263 = vsel %vm262, %v261, %v259
        %vm264 = vcmask 261120
        %v265 = vsel %vm264, %v263, 0
        %v268 = vsel %vm264, %v244, 0
        %270 = vmatpush.xpose.msra.mxu0 0.0
        %271 = vmatpush.xpose.msra.mxu0 0.0
        %272 = vmatpush.xpose.msra.mxu0 0.0
        %273 = vmatpush.xpose.msra.mxu0 0.0
        %274 = vmatpush.xpose.msra.mxu0 0.0
        %275 = vmatpush.xpose.msra.mxu0 0.0
        %276 = vmatpush.xpose.msra.mxu0 0.0
        %277 = vmatpush.xpose.msra.mxu0 0.0
        %278 = vmatpush.xpose.msra.mxu0 0.0
        %279 = vmatpush.xpose.msra.mxu0 0.0
        %280 = vmatpush.xpose.msra.mxu0 0.0
        %281 = vmatpush.xpose.msra.mxu0 0.0
        %282 = vmatpush.xpose.msra.mxu0 0.0
        %283 = vmatpush.xpose.msra.mxu0 0.0
        %284 = vmatpush.xpose.msra.mxu0 0.0
        %285 = vmatpush.xpose.msra.mxu0 %v268
        %286 = vmatmul.f32.gmra.mxu0 %v265
        %v287 = vpop.f32.mrf.mxu0
        %v288 = vadd.f32 0.0, %v287
        %289 = vdwg.mxu0
        %v290 = vmax.f32 %v288, 0.0
        %v291 = vld [vmem:[#allocation7] sm:$0x3]
        %vm292 = vcmask 15360
        %v294 = vsel %vm292, %v290, 0
        %vm296 = vcmask 1041408
        %v298 = vsel %vm296, %v291, 0
        %300 = vmatpush.msra.mxu0 0.0
        %301 = vmatpush.msra.mxu0 0.0
        %302 = vmatpush.msra.mxu0 0.0
        %303 = vmatpush.msra.mxu0 0.0
        %304 = vmatpush.msra.mxu0 0.0
        %305 = vmatpush.msra.mxu0 0.0
        %306 = vmatpush.msra.mxu0 0.0
        %307 = vmatpush.msra.mxu0 0.0
        %308 = vmatpush.msra.mxu0 0.0
        %309 = vmatpush.msra.mxu0 0.0
        %310 = vmatpush.msra.mxu0 0.0
        %311 = vmatpush.msra.mxu0 0.0
        %312 = vmatpush.msra.mxu0 0.0
        %313 = vmatpush.msra.mxu0 0.0
        %314 = vmatpush.msra.mxu0 0.0
        %315 = vmatpush.msra.mxu0 %v298
        %316 = vmatmul.f32.gmra.mxu0 %v294
        %v317 = vpop.f32.mrf.mxu0
        %v318 = vadd.f32 0.0, %v317
        %319 = vdwg.mxu0
        %v320 = vxor.u32 %v318, 2147483648
        %v321 = vmul.f32 %v320, 1.442695
        %v322 = vpow.pop %v321
        %v323 = vadd.f32 %v322, 1.0
        %v324 = vrcp.pop %v323
        %v325 = vmul.f32 %v323, %v324
        %v326 = vsub.f32 1.0, %v325
        %v327 = vmul.f32 %v324, %v326
        %v328 = vadd.f32 %v324, %v327
        %vm329 = vweird.f32 %v323
        %vm330 = vweird.f32 %v324
        %vm331 = vmor %vm329, %vm330
        %v332 = vsel %vm331, %v324, %v328
        %v333 = vand.u32 2147483647, %v323
        %vm334 = vcmp.eq.f32.partialorder %v333, 8.507059e+37
        %v335 = vand.u32 %v323, 2147483648
        %v336 = vor.u32 1.1754944e-38, %v335
        %v337 = vsel %vm334, %v336, %v332
        %v338 = vmul.f32 1.0, %v337
        %v339 = vperm.slane %v338, 0
        %v340 = vlaneseq
        %v341 = vshrl.u32 %v340, 7
        %343 = vset.pattern.permute.xlu0 %v341
        %344 = vperm.xlu0 %343, %v339
        %v345 = vpop.permute.xlu0 %344
        %v346 = vlaneseq
        %v347 = vshrl.u32 %v346, 7
        %v348 = vadd.s32 %v347, 8
        %349 = vset.pattern.permute.xlu0 %v348
        %350 = vperm.xlu0 %349, %v339
        %v351 = vpop.permute.xlu0 %350
        %v352 = vlaneseq
        %v353 = vshrl.u32 %v352, 7
        %v354 = vadd.s32 %v353, 16
        %355 = vset.pattern.permute.xlu0 %v354
        %356 = vperm.xlu0 %355, %v339
        %v357 = vpop.permute.xlu0 %356
        %v358 = vlaneseq
        %v359 = vshrl.u32 %v358, 7
        %v360 = vadd.s32 %v359, 24
        %361 = vset.pattern.permute.xlu0 %v360
        %362 = vperm.xlu0 %361, %v339
        %v363 = vpop.permute.xlu0 %362
        %v364 = vmul.f32 %v220, %v345
        %v365 = vmul.f32 %v221, %v345
        %v366 = vmul.f32 %v222, %v351
        %v367 = vmul.f32 %v223, %v351
        %v368 = vmul.f32 %v224, %v357
        %v369 = vmul.f32 %v225, %v357
        %v370 = vmul.f32 %v226, %v363
        %v371 = vmul.f32 %v227, %v363
        %372 = vst [vmem:[%s219] sm:$0xff] %v364
        %373 = vst [vmem:[%s219 + $0x8] sm:$0xff] %v365
        %374 = vst [vmem:[%s219 + $0x10] sm:$0xff] %v366
        %375 = vst [vmem:[%s219 + $0x18] sm:$0xff] %v367
        %376 = vst [vmem:[%s219 + $0x20] sm:$0xff] %v368
        %377 = vst [vmem:[%s219 + $0x28] sm:$0xff] %v369
        %378 = vst [vmem:[%s219 + $0x30] sm:$0xff] %v370
        %379 = vst [vmem:[%s219 + $0x38] sm:$0xff] %v371
        %s380 = sand.u32 %s97, 1
        %s381 = scalar_lea.sflag [#allocation4], %s380
        %s382 = sand.u32 %s97, 1
        %s383 = smul.addr %s382, 64
        %s384 = scalar_lea.vmem [#allocation8], %s383
        // Predicated region
        $region45: #{tpu_custom_call.1} parent=31 // pred_check
          %p385 = pneg %p107
        $region46: #{tpu_custom_call.1} parent=31 // pred_check_branch
          %387 = sbr.rel (%p385) target = $region48
        $region47: #{tpu_custom_call.1} parent=31 // pred_region
          %389 = vsyncadd %s381, 0
          %s390 = smul.addr %s21, 8
          %s391 = smul.addr %s390, 8
          %s392 = scalar_lea.hbm %s3, %s391
          %s393 = sshll.u32 %s384, 4
          %s394 = int_to_ptr.vmem [resolvable:$true] %s393
          %s395 = sshll.u32 %s392, 4
          %s396 = int_to_ptr.hbm [resolvable:$true] %s395
          %401 = dma.vmem_to_hbm [thread:$0]  %s394, 1024, %s396, %s381, 256, 256, 16
        $region48: #{tpu_custom_call.1} parent=31 // pred_fallthru
          _
      $region32: #{tpu_custom_call.1} parent=5 // pred_fallthru
        _
      %p402 = scmp.le.s32.totalorder 2, %s16
      // Predicated region
      $region49: #{tpu_custom_call.1} parent=5 // pred_check
        %p403 = pneg %p402
      $region50: #{tpu_custom_call.1} parent=5 // pred_check_branch
        %405 = sbr.rel (%p403) target = $region52
      $region51: #{tpu_custom_call.1} parent=5 // pred_region
        %s406 = ssub.s32 %s16, 2
        // Predicated region
        $region53: #{tpu_custom_call.1} parent=51 // pred_check
          %p407 = pneg %p113
        $region54: #{tpu_custom_call.1} parent=51 // pred_check_branch
          %409 = sbr.rel (%p407) target = $region56
        $region55: #{tpu_custom_call.1} parent=51 // pred_region
          %s410 = sand.u32 %s98, 1
          %s411 = scalar_lea.sflag [#allocation4], %s410
          %s412 = sand.u32 %s98, 1
          %s413 = smul.addr %s412, 64
          %s414 = scalar_lea.vmem [#allocation8], %s413
          %416 = dma.done %s411, 1024
        $region56: #{tpu_custom_call.1} parent=51 // pred_fallthru
          _
      $region52: #{tpu_custom_call.1} parent=5 // pred_fallthru
        _
    $region6: #{tpu_custom_call.1} parent=1 // loop_footer
      %s20 = sadd.s32 1, %s16
    $region7: #{tpu_custom_call.1} parent=1 // loop_footer_branch
      %15 = sbr.rel target = $region3
    $region8: #{tpu_custom_call.1} parent=1 // loop_exit
      _
    %417 = vsyncpa [#allocation3], 1
    %s418 = scalar_lea.sflag [#allocation3], 1
    %419 = vsyncpa %s418, 1
    %420 = vsyncpa [#allocation6], 1
    %421 = vsyncpa [#allocation4], 1
    %s422 = scalar_lea.sflag [#allocation4], 1
    %423 = vsyncpa %s422, 1

</llo_original>
